<compile_context>
chip_gen: v7x
topology: tpu7x:2x2x1
jax: 0.10.0
libtpu: 0.0.40
codegen_flags: <defaults>
</compile_context>

<pallas_src>
import functools

import jax
import jax.numpy as jnp
from jax.experimental import pallas as pl
from jax.experimental.pallas import tpu as pltpu

BN_EPS = 1e-5
DEG_EPS = 1e-5


def graph_conv_kernel(x_ref, a_ref, m_ref, wT_ref, b_ref, shift_ref, out_ref,
                      *, bt, n):
    """One grid step processes `bt` batch elements.

    x_ref     (bt*n, Fin)   node features, batch flattened into rows
    a_ref     (bt, n, n)    adjacency
    m_ref     (bt*n, 1)     node mask
    wT_ref    (Fin, Fout)   fc weight^T with BN scale folded in
    b_ref     (1, Fout)     fc bias with BN scale folded in
    shift_ref (1, Fout)     BN additive term (beta - mean * scale)
    out_ref   (bt*n, Fout)
    """
    ys = []
    for b in range(bt):  # static unroll, bt is small
        A = a_ref[b]                                   # (n, n)
        xb = x_ref[pl.ds(b * n, n), :]                 # (n, Fin)

        # D_hat[j] = rsqrt(sum_i (A + I)[i, j] + eps)
        #          = rsqrt(sum_i A[i, j] + 1 + eps)
        # (matches torch.sum(A_hat, 1): reduction over the row index)
        deg = jnp.sum(A, axis=0, keepdims=True) + (1.0 + DEG_EPS)   # (1, n)
        d = jax.lax.rsqrt(deg)                                      # (1, n)
        d_col = jnp.transpose(d)                                    # (n, 1)

        # L @ x == d_col * ((A + I) @ (d_col * x))
        #       == d_col * (A @ (d_col * x) + d_col * x)
        xs = d_col * xb                                             # (n, Fin)
        ax = jnp.dot(A, xs, preferred_element_type=jnp.float32)     # (n, Fin)
        ys.append(d_col * (ax + xs))

    y = ys[0] if bt == 1 else jnp.concatenate(ys, axis=0)           # (bt*n, Fin)

    # fc + bias + mask + eval-BatchNorm, with BN folded into wT/b/shift:
    #   ((L@x) @ (wT*s) + b*s) * mask + (beta - mean*s)
    z = jnp.dot(y, wT_ref[...], preferred_element_type=jnp.float32) + b_ref[...]
    z = z * m_ref[...] + shift_ref[...]

    # activation is None in the default constructor -> identity
    out_ref[...] = z.astype(out_ref.dtype)


def graph_conv_forward(x, A, mask, W, b, gamma, beta, run_mean, run_var,
                       *, batch_tile=None):
    """Forward of GraphConv (K=1, n_relations=1, eval BN). Returns (out, A, mask)."""
    B, N, Fin = x.shape
    Fout = W.shape[0]

    mask3 = mask[:, :, None] if mask.ndim == 2 else mask            # [B, N, 1]

    # --- host-side: fold eval BatchNorm + bias into the fc weights (exact) ---
    s = gamma * jax.lax.rsqrt(run_var + BN_EPS)                     # (1, Fout)
    wT_s = jnp.transpose(W) * s                                     # (Fin, Fout)
    b_s = b * s                                                     # (1, Fout)
    shift = beta - run_mean * s                                     # (1, Fout)

    # --- batch tiling: amortize per-grid-step overhead over several elements ---
    if batch_tile is None:
        batch_tile = min(B, 8)
        while B % batch_tile:
            batch_tile -= 1
    bt = batch_tile
    assert B % bt == 0
    num_tiles = B // bt

    # Flatten batch into rows (free, contiguous reshape) so the fc is one tall GEMM.
    x2 = x.reshape(B * N, Fin)
    m2 = mask3.reshape(B * N, 1)

    flops = 2 * B * N * N * Fin + 2 * B * N * Fin * Fout
    bytes_accessed = 4 * (B * N * Fin + B * N * N + B * N
                          + Fin * Fout + 3 * Fout + B * N * Fout)

    kernel = functools.partial(graph_conv_kernel, bt=bt, n=N)

    out2 = pl.pallas_call(
        kernel,
        out_shape=jax.ShapeDtypeStruct((B * N, Fout), jnp.float32),
        grid=(num_tiles,),
        in_specs=[
            pl.BlockSpec((bt * N, Fin), lambda i: (i, 0)),          # x (flattened)
            pl.BlockSpec((bt, N, N),    lambda i: (i, 0, 0)),       # A
            pl.BlockSpec((bt * N, 1),   lambda i: (i, 0)),          # mask (flattened)
            pl.BlockSpec((Fin, Fout),   lambda i: (0, 0)),          # wT * bn_scale
            pl.BlockSpec((1, Fout),     lambda i: (0, 0)),          # bias * bn_scale
            pl.BlockSpec((1, Fout),     lambda i: (0, 0)),          # bn shift
        ],
        out_specs=pl.BlockSpec((bt * N, Fout), lambda i: (i, 0)),
        compiler_params=pltpu.CompilerParams(
            dimension_semantics=("parallel",)),
        cost_estimate=pl.CostEstimate(
            flops=flops, transcendentals=B * N, bytes_accessed=bytes_accessed),
    )(x2, A, m2, wT_s, b_s, shift)

    out = out2.reshape(B, N, Fout)
    return out, A, mask3


def reference_forward(x, A, mask, W, b, gamma, beta, run_mean, run_var):
    # Pure-JAX mirror of the PyTorch module (K=1, n_relations=1, eval BN),
    # written the "naive" way (explicit eye, dense L, unfused BN) to validate
    # the kernel's algebraic rewrite and BN folding.
    B, N, _ = x.shape
    A_hat = A + jnp.eye(N, dtype=A.dtype)[None]
    D = (jnp.sum(A_hat, axis=1) + 1e-5) ** -0.5          # == torch.sum(A_hat, 1)
    L = D[:, :, None] * A_hat * D[:, None, :]
    y = jnp.einsum('bij,bjf->bif', L, x)
    z = jnp.einsum('bif,of->bio', y, W) + b
    z = z * mask[:, :, None]
    z = (z - run_mean) * jax.lax.rsqrt(run_var + BN_EPS) * gamma + beta
    return z


if __name__ == "__main__":
    B, N, Fin, Fout = 2, 16, 32, 32

    key = jax.random.PRNGKey(0)
    kx, ka, kw, kb = jax.random.split(key, 4)

    x = jax.random.normal(kx, (B, N, Fin), dtype=jnp.float32)
    # Deliberately NON-symmetric adjacency: exercises the torch.sum(A_hat, 1)
    # (column-sum) degree convention, which the kernel matches exactly.
    A = jax.random.uniform(ka, (B, N, N), dtype=jnp.float32)
    mask = jnp.ones((B, N), dtype=jnp.float32).at[1, N - 4:].set(0.0)

    # nn.Linear(in=Fin, out=Fout) default init: U(-1/sqrt(fan_in), 1/sqrt(fan_in))
    bound = 1.0 / jnp.sqrt(jnp.float32(Fin))
    W = jax.random.uniform(kw, (Fout, Fin), jnp.float32, -bound, bound)
    b = jax.random.uniform(kb, (1, Fout), jnp.float32, -bound, bound)

    # BatchNorm1d default params / running stats (eval mode).
    gamma = jnp.ones((1, Fout), jnp.float32)
    beta = jnp.zeros((1, Fout), jnp.float32)
    run_mean = jnp.zeros((1, Fout), jnp.float32)
    run_var = jnp.ones((1, Fout), jnp.float32)

    out, A_out, mask_out = graph_conv_forward(
        x, A, mask, W, b, gamma, beta, run_mean, run_var)
    out = jax.block_until_ready(out)

    ref = reference_forward(x, A, mask, W, b, gamma, beta, run_mean, run_var)
    assert jnp.allclose(out, ref, atol=1e-4, rtol=1e-4), \
        float(jnp.max(jnp.abs(out - ref)))

    print("KERNEL_OK")
</pallas_src>

<mosaic_0001>
module attributes {stable_mosaic.version = 11 : i64} {
  func.func @graph_conv_kernel(%arg0: i32, %arg1: memref<32x32xf32, #tpu.memory_space<vmem>>, %arg2: memref<2x16x16xf32, #tpu.memory_space<vmem>>, %arg3: memref<32x1xf32, #tpu.memory_space<vmem>>, %arg4: memref<32x32xf32, #tpu.memory_space<vmem>>, %arg5: memref<1x32xf32, #tpu.memory_space<vmem>>, %arg6: memref<1x32xf32, #tpu.memory_space<vmem>>, %arg7: memref<32x32xf32, #tpu.memory_space<vmem>>) attributes {dimension_semantics = [#tpu.dimension_semantics<parallel>], iteration_bounds = array<i64: 1>, scalar_prefetch = 0 : i64, scratch_operands = 0 : i64, tpu.core_type = #tpu.core_type<tc>, window_params = [{transform_indices = @transform_0, window_bounds = array<i64: 32, 32>}, {transform_indices = @transform_1, window_bounds = array<i64: 2, 16, 16>}, {transform_indices = @transform_2, window_bounds = array<i64: 32, 1>}, {pipeline_mode = #tpu.pipeline_mode<synchronous>, transform_indices = @transform_3, window_bounds = array<i64: 32, 32>}, {pipeline_mode = #tpu.pipeline_mode<synchronous>, transform_indices = @transform_4, window_bounds = array<i64: 1, 32>}, {pipeline_mode = #tpu.pipeline_mode<synchronous>, transform_indices = @transform_5, window_bounds = array<i64: 1, 32>}, {transform_indices = @transform_6, window_bounds = array<i64: 32, 32>}]} {
    %c0 = arith.constant 0 : index
    %c0_0 = arith.constant 0 : index
    %c0_1 = arith.constant 0 : index
    %0 = vector.load %arg2[%c0, %c0_0, %c0_1] : memref<2x16x16xf32, #tpu.memory_space<vmem>>, vector<1x16x16xf32>
    %1 = vector.shape_cast %0 : vector<1x16x16xf32> to vector<16x16xf32>
    %c0_2 = arith.constant 0 : index
    %c0_3 = arith.constant 0 : index
    %2 = vector.load %arg1[%c0_2, %c0_3] : memref<32x32xf32, #tpu.memory_space<vmem>>, vector<16x32xf32>
    %cst = arith.constant dense<0.000000e+00> : vector<16xf32>
    %3 = vector.multi_reduction <add>, %1, %cst [0] : vector<16x16xf32> to vector<16xf32>
    %4 = vector.shape_cast %3 : vector<16xf32> to vector<1x16xf32>
    %cst_4 = arith.constant 1.000010e+00 : f32
    %5 = vector.broadcast %cst_4 : f32 to vector<1x16xf32>
    %6 = arith.addf %4, %5 : vector<1x16xf32>
    %7 = math.rsqrt %6 : vector<1x16xf32>
    %8 = tpu.transpose %7, [1, 0] : vector<1x16xf32> -> vector<16x1xf32>
    %9 = vector.broadcast %8 : vector<16x1xf32> to vector<16x32xf32>
    %10 = arith.mulf %9, %2 : vector<16x32xf32>
    %cst_5 = arith.constant dense<0.000000e+00> : vector<16x32xf32>
    %11 = tpu.matmul %1, %10, %cst_5 {dimension_numbers = #tpu.dot_dimension_numbers<[1], [0], [0], [1], [0, 0, 1, 1], [], []>} : vector<16x16xf32>, vector<16x32xf32>, vector<16x32xf32> -> vector<16x32xf32>
    %12 = arith.addf %11, %10 : vector<16x32xf32>
    %13 = vector.broadcast %8 : vector<16x1xf32> to vector<16x32xf32>
    %14 = arith.mulf %13, %12 : vector<16x32xf32>
    %c1 = arith.constant 1 : index
    %c0_6 = arith.constant 0 : index
    %c0_7 = arith.constant 0 : index
    %15 = vector.load %arg2[%c1, %c0_6, %c0_7] : memref<2x16x16xf32, #tpu.memory_space<vmem>>, vector<1x16x16xf32>
    %16 = vector.shape_cast %15 : vector<1x16x16xf32> to vector<16x16xf32>
    %c16 = arith.constant 16 : index
    %c0_8 = arith.constant 0 : index
    %17 = vector.load %arg1[%c16, %c0_8] : memref<32x32xf32, #tpu.memory_space<vmem>>, vector<16x32xf32>
    %cst_9 = arith.constant dense<0.000000e+00> : vector<16xf32>
    %18 = vector.multi_reduction <add>, %16, %cst_9 [0] : vector<16x16xf32> to vector<16xf32>
    %19 = vector.shape_cast %18 : vector<16xf32> to vector<1x16xf32>
    %cst_10 = arith.constant 1.000010e+00 : f32
    %20 = vector.broadcast %cst_10 : f32 to vector<1x16xf32>
    %21 = arith.addf %19, %20 : vector<1x16xf32>
    %22 = math.rsqrt %21 : vector<1x16xf32>
    %23 = tpu.transpose %22, [1, 0] : vector<1x16xf32> -> vector<16x1xf32>
    %24 = vector.broadcast %23 : vector<16x1xf32> to vector<16x32xf32>
    %25 = arith.mulf %24, %17 : vector<16x32xf32>
    %cst_11 = arith.constant dense<0.000000e+00> : vector<16x32xf32>
    %26 = tpu.matmul %16, %25, %cst_11 {dimension_numbers = #tpu.dot_dimension_numbers<[1], [0], [0], [1], [0, 0, 1, 1], [], []>} : vector<16x16xf32>, vector<16x32xf32>, vector<16x32xf32> -> vector<16x32xf32>
    %27 = arith.addf %26, %25 : vector<16x32xf32>
    %28 = vector.broadcast %23 : vector<16x1xf32> to vector<16x32xf32>
    %29 = arith.mulf %28, %27 : vector<16x32xf32>
    %30 = tpu.concatenate %14, %29 in 0 : vector<16x32xf32>, vector<16x32xf32> -> vector<32x32xf32>
    %c0_12 = arith.constant 0 : index
    %c0_13 = arith.constant 0 : index
    %31 = vector.load %arg4[%c0_12, %c0_13] : memref<32x32xf32, #tpu.memory_space<vmem>>, vector<32x32xf32>
    %cst_14 = arith.constant dense<0.000000e+00> : vector<32x32xf32>
    %32 = tpu.matmul %30, %31, %cst_14 {dimension_numbers = #tpu.dot_dimension_numbers<[1], [0], [0], [1], [0, 0, 1, 1], [], []>} : vector<32x32xf32>, vector<32x32xf32>, vector<32x32xf32> -> vector<32x32xf32>
    %c0_15 = arith.constant 0 : index
    %c0_16 = arith.constant 0 : index
    %33 = vector.load %arg5[%c0_15, %c0_16] : memref<1x32xf32, #tpu.memory_space<vmem>>, vector<1x32xf32>
    %34 = vector.broadcast %33 : vector<1x32xf32> to vector<32x32xf32>
    %35 = arith.addf %32, %34 : vector<32x32xf32>
    %c0_17 = arith.constant 0 : index
    %c0_18 = arith.constant 0 : index
    %36 = vector.load %arg3[%c0_17, %c0_18] : memref<32x1xf32, #tpu.memory_space<vmem>>, vector<32x1xf32>
    %37 = vector.broadcast %36 : vector<32x1xf32> to vector<32x32xf32>
    %38 = arith.mulf %35, %37 : vector<32x32xf32>
    %c0_19 = arith.constant 0 : index
    %c0_20 = arith.constant 0 : index
    %39 = vector.load %arg6[%c0_19, %c0_20] : memref<1x32xf32, #tpu.memory_space<vmem>>, vector<1x32xf32>
    %40 = vector.broadcast %39 : vector<1x32xf32> to vector<32x32xf32>
    %41 = arith.addf %38, %40 : vector<32x32xf32>
    %c0_21 = arith.constant 0 : index
    %c0_22 = arith.constant 0 : index
    %42 = vector.load %arg7[%c0_21, %c0_22] : memref<32x32xf32, #tpu.memory_space<vmem>>, vector<32x32xf32>
    tpu.vector_store %arg7[%c0_21, %c0_22], %41 {strides = array<i32>} : memref<32x32xf32, #tpu.memory_space<vmem>>, vector<32x32xf32>,
    return
  }
  func.func @transform_0(%arg0: i32) -> (i32, i32) {
    %c0_i32 = arith.constant 0 : i32
    %c0_i32_0 = arith.constant 0 : i32
    return %arg0, %c0_i32 : i32, i32
  }
  func.func @transform_1(%arg0: i32) -> (i32, i32, i32) {
    %c0_i32 = arith.constant 0 : i32
    %c0_i32_0 = arith.constant 0 : i32
    %c0_i32_1 = arith.constant 0 : i32
    return %arg0, %c0_i32, %c0_i32_0 : i32, i32, i32
  }
  func.func @transform_2(%arg0: i32) -> (i32, i32) {
    %c0_i32 = arith.constant 0 : i32
    %c0_i32_0 = arith.constant 0 : i32
    return %arg0, %c0_i32 : i32, i32
  }
  func.func @transform_3(%arg0: i32) -> (i32, i32) {
    %c0_i32 = arith.constant 0 : i32
    %c0_i32_0 = arith.constant 0 : i32
    %c0_i32_1 = arith.constant 0 : i32
    return %c0_i32, %c0_i32_0 : i32, i32
  }
  func.func @transform_4(%arg0: i32) -> (i32, i32) {
    %c0_i32 = arith.constant 0 : i32
    %c0_i32_0 = arith.constant 0 : i32
    %c0_i32_1 = arith.constant 0 : i32
    return %c0_i32, %c0_i32_0 : i32, i32
  }
  func.func @transform_5(%arg0: i32) -> (i32, i32) {
    %c0_i32 = arith.constant 0 : i32
    %c0_i32_0 = arith.constant 0 : i32
    %c0_i32_1 = arith.constant 0 : i32
    return %c0_i32, %c0_i32_0 : i32, i32
  }
  func.func @transform_6(%arg0: i32) -> (i32, i32) {
    %c0_i32 = arith.constant 0 : i32
    %c0_i32_0 = arith.constant 0 : i32
    return %arg0, %c0_i32 : i32, i32
  }
}

</mosaic_0001>

<llo_original>
// kernel: tpu_custom_call.1
$region0: #{tpu_custom_call.1}
  #allocation0 [shape = 'u32[]', space=smem, size = 0x4, offset = 0x4, fixed_abs, tag = 'smem constant byte address 0x4 - core index']
  #allocation1 [shape = 'u32[144,128]{1,0:T(1,128)}', space=vmem, size = 0x12000, scoped, tag = 'internal scratch']
  %s0 = inlined_call_operand.vmem [shape: f32[32,32], index: 0, kind: input, shape index: {}]
  %s1 = inlined_call_operand.hbm [shape: f32[2,16,16], index: 1, kind: input, shape index: {}]
  %s2 = inlined_call_operand.vmem [shape: f32[32,1], index: 2, kind: input, shape index: {}]
  %s3 = inlined_call_operand.hbm [shape: f32[32,32], index: 3, kind: input, shape index: {}]
  %s4 = inlined_call_operand.vmem [shape: f32[1,32], index: 4, kind: input, shape index: {}]
  %s5 = inlined_call_operand.vmem [shape: f32[1,32], index: 5, kind: input, shape index: {}]
  %s6 = inlined_call_operand.hbm [shape: f32[32,32], index: 6, kind: output, shape index: {}]
  %s7 = sld [smem:[#allocation0]]
  $region42: #{tpu_custom_call.1} parent=0
    _
  %s9 = ssub.s32 1, %s7
  %s10 = scalar_select 0, %s9, %s7
  $region1: #{tpu_custom_call.1} parent=0
    #allocation2 [shape = 'u8[16384]{0}', space=vmem, size = 0x4000, scoped, tag = 'input window, operand 1, single buffered']
    #allocation3 [shape = 's32[1]{0}', space=sflag, size = 0x4, scoped, tag = 'scoped memory for tpu_custom_call.1']
    #allocation4 [shape = 's32[1]{0}', space=sflag, size = 0x4, scoped, tag = 'scoped memory for tpu_custom_call.1']
    #allocation5 [shape = 'u8[16384]{0}', space=vmem, size = 0x4000, scoped, tag = 'input window, operand 3, single buffered']
    #allocation6 [shape = 's32[1]{0}', space=sflag, size = 0x4, scoped, tag = 'scoped memory for tpu_custom_call.1']
    #allocation7 [shape = 'u8[16384]{0}', space=vmem, size = 0x4000, scoped, tag = 'output window, operand 0, single buffered']
    %11 = vsyncpa [#allocation3], 0
    %12 = vsyncpa [#allocation6], 0
    %13 = vsyncpa [#allocation4], 0
    // Predicated region
    $region2: #{tpu_custom_call.1} parent=1 // pred_check
      _
    $region3: #{tpu_custom_call.1} parent=1 // pred_check_branch
      %15 = sbr.rel (0) target = $region5
    $region4: #{tpu_custom_call.1} parent=1 // pred_region
      _
    $region5: #{tpu_custom_call.1} parent=1 // pred_fallthru
      _
    // Predicated region
    $region6: #{tpu_custom_call.1} parent=1 // pred_check
      _
    $region7: #{tpu_custom_call.1} parent=1 // pred_check_branch
      %17 = sbr.rel (0) target = $region9
    $region8: #{tpu_custom_call.1} parent=1 // pred_region
      %s19 = ssub.s32 512, 512
      %20 = vsyncadd [#allocation3], %s19
      %s21 = sshll.u32 [#allocation2], 4
      %s22 = int_to_ptr.vmem [resolvable:$true] %s21
      %27 = dma.hbm_to_vmem [thread:$0]  %s1, 512, %s22, [#allocation3], 128, 128, 8
    $region9: #{tpu_custom_call.1} parent=1 // pred_fallthru
      _
    // Predicated region
    $region10: #{tpu_custom_call.1} parent=1 // pred_check
      _
    $region11: #{tpu_custom_call.1} parent=1 // pred_check_branch
      %29 = sbr.rel (0) target = $region13
    $region12: #{tpu_custom_call.1} parent=1 // pred_region
      _
    $region13: #{tpu_custom_call.1} parent=1 // pred_fallthru
      _
    // Predicated region
    $region14: #{tpu_custom_call.1} parent=1 // pred_check
      _
    $region15: #{tpu_custom_call.1} parent=1 // pred_check_branch
      %31 = sbr.rel (0) target = $region17
    $region16: #{tpu_custom_call.1} parent=1 // pred_region
      %s33 = ssub.s32 512, 512
      %34 = vsyncadd [#allocation6], %s33
      %s35 = sshll.u32 [#allocation5], 4
      %s36 = int_to_ptr.vmem [resolvable:$true] %s35
      %41 = dma.hbm_to_vmem [thread:$0]  %s3, 512, %s36, [#allocation6], 128, 128, 8
    $region17: #{tpu_custom_call.1} parent=1 // pred_fallthru
      _
    // Predicated region
    $region18: #{tpu_custom_call.1} parent=1 // pred_check
      _
    $region19: #{tpu_custom_call.1} parent=1 // pred_check_branch
      %43 = sbr.rel (0) target = $region21
    $region20: #{tpu_custom_call.1} parent=1 // pred_region
      _
    $region21: #{tpu_custom_call.1} parent=1 // pred_fallthru
      _
    // Predicated region
    $region22: #{tpu_custom_call.1} parent=1 // pred_check
      _
    $region23: #{tpu_custom_call.1} parent=1 // pred_check_branch
      %45 = sbr.rel (0) target = $region25
    $region24: #{tpu_custom_call.1} parent=1 // pred_region
      _
    $region25: #{tpu_custom_call.1} parent=1 // pred_fallthru
      _
    // Predicated region
    $region26: #{tpu_custom_call.1} parent=1 // pred_check
      _
    $region27: #{tpu_custom_call.1} parent=1 // pred_check_branch
      %47 = sbr.rel (0) target = $region29
    $region28: #{tpu_custom_call.1} parent=1 // pred_region
      %48 = dma.done [#allocation3], 512
    $region29: #{tpu_custom_call.1} parent=1 // pred_fallthru
      _
    // Predicated region
    $region30: #{tpu_custom_call.1} parent=1 // pred_check
      _
    $region31: #{tpu_custom_call.1} parent=1 // pred_check_branch
      %50 = sbr.rel (0) target = $region33
    $region32: #{tpu_custom_call.1} parent=1 // pred_region
      %51 = dma.done [#allocation6], 512
    $region33: #{tpu_custom_call.1} parent=1 // pred_fallthru
      _
    %v52 = vld [vmem:[#allocation2] sm:$0xff]
    %v53 = vld [vmem:[#allocation2 + $0x8] sm:$0xff]
    %v54 = vld [vmem:[%s0] sm:$0xff]
    %v55 = vld [vmem:[%s0 + $0x8] sm:$0xff]
    %vm56 = vcmask 130048
    %v57 = vsel %vm56, %v52, 0.0
    %v58 = vsel %vm56, %v53, 0.0
    %v59 = vadd.f32 %v57, %v58
    %v60 = vrot.slane %v59, 4
    %v61 = vadd.f32 %v59, %v60
    %v62 = vrot.slane %v61, 2
    %v63 = vadd.f32 %v61, %v62
    %v64 = vrot.slane %v63, 1
    %v65 = vadd.f32 %v63, %v64
    %v66 = vadd.f32 %v65, 1.00001
    %v67 = vrsqrt.pop %v66
    %68 = vxpose.xlu0.b32.start [1/16] %v67, 128
    %69 = vxpose.xlu0.b32.cont [2/16] 0.0, 128
    %70 = vxpose.xlu0.b32.cont [3/16] 0.0, 128
    %71 = vxpose.xlu0.b32.cont [4/16] 0.0, 128
    %72 = vxpose.xlu0.b32.cont [5/16] 0.0, 128
    %73 = vxpose.xlu0.b32.cont [6/16] 0.0, 128
    %74 = vxpose.xlu0.b32.cont [7/16] 0.0, 128
    %75 = vxpose.xlu0.b32.cont [8/16] 0.0, 128
    %76 = vxpose.xlu0.b32.cont [9/16] 0.0, 128
    %77 = vxpose.xlu0.b32.cont [10/16] 0.0, 128
    %78 = vxpose.xlu0.b32.cont [11/16] 0.0, 128
    %79 = vxpose.xlu0.b32.cont [12/16] 0.0, 128
    %80 = vxpose.xlu0.b32.cont [13/16] 0.0, 128
    %81 = vxpose.xlu0.b32.cont [14/16] 0.0, 128
    %82 = vxpose.xlu0.b32.cont [15/16] 0.0, 128
    %83 = vxpose.xlu0.b32.end [16/16] 0.0, 128
    %v84 = vpop.trf.xlu0
    %v85 = vpop.trf.xlu0
    %v86 = vpop.trf.xlu0
    %v87 = vpop.trf.xlu0
    %v88 = vpop.trf.xlu0
    %v89 = vpop.trf.xlu0
    %v90 = vpop.trf.xlu0
    %v91 = vpop.trf.xlu0
    %v92 = vpop.trf.xlu0
    %v93 = vpop.trf.xlu0
    %v94 = vpop.trf.xlu0
    %v95 = vpop.trf.xlu0
    %v96 = vpop.trf.xlu0
    %v97 = vpop.trf.xlu0
    %v98 = vpop.trf.xlu0
    %v99 = vpop.trf.xlu0
    %101 = vset.pattern.permute.xlu0 0
    %102 = vperm.xlu0 %101, %v84
    %v103 = vpop.permute.xlu0 %102
    %106 = vset.pattern.permute.xlu0 0
    %107 = vperm.xlu0 %106, %v85
    %v108 = vpop.permute.xlu0 %107
    %v110 = vmul.f32 %v103, %v54
    %v111 = vmul.f32 %v108, %v55
    %v113 = vsel %vm56, %v52, 0
    %v116 = vsel %vm56, %v53, 0
    %118 = vmatprep.subr.mxu0 0.0
    %119 = vmatpush1.msra.mxu0 %v110
    %120 = vmatprep.subr.mxu0 0.0
    %121 = vmatpush1.msra.mxu0 %v111
    %122 = vmatprep.subr.mxu0 0.0
    %123 = vmatpush1.msra.mxu0 0.0
    %124 = vmatprep.subr.mxu0 0.0
    %125 = vmatpush1.msra.mxu0 0.0
    %126 = vmatprep.subr.mxu0 0.0
    %127 = vmatpush1.msra.mxu0 0.0
    %128 = vmatprep.subr.mxu0 0.0
    %129 = vmatpush1.msra.mxu0 0.0
    %130 = vmatprep.subr.mxu0 0.0
    %131 = vmatpush1.msra.mxu0 0.0
    %132 = vmatprep.subr.mxu0 0.0
    %133 = vmatpush1.msra.mxu0 0.0
    %134 = vmatprep.subr.mxu0 0.0
    %135 = vmatpush1.msra.mxu0 0.0
    %136 = vmatprep.subr.mxu0 0.0
    %137 = vmatpush1.msra.mxu0 0.0
    %138 = vmatprep.subr.mxu0 0.0
    %139 = vmatpush1.msra.mxu0 0.0
    %140 = vmatprep.subr.mxu0 0.0
    %141 = vmatpush1.msra.mxu0 0.0
    %142 = vmatprep.subr.mxu0 0.0
    %143 = vmatpush1.msra.mxu0 0.0
    %144 = vmatprep.subr.mxu0 0.0
    %145 = vmatpush1.msra.mxu0 0.0
    %146 = vmatprep.subr.mxu0 0.0
    %147 = vmatpush1.msra.mxu0 0.0
    %148 = vmatprep.subr.mxu0 0.0
    %149 = vmatpush1.msra.mxu0 0.0
    %150 = vmatprep.subr.mxu0 0.0
    %151 = vmatpush1.msra.mxu0 0.0
    %152 = vmatprep.subr.mxu0 0.0
    %153 = vmatpush1.msra.mxu0 0.0
    %154 = vmatprep.subr.mxu0 0.0
    %155 = vmatpush1.msra.mxu0 0.0
    %156 = vmatprep.subr.mxu0 0.0
    %157 = vmatpush1.msra.mxu0 0.0
    %158 = vmatprep.subr.mxu0 0.0
    %159 = vmatpush1.msra.mxu0 0.0
    %160 = vmatprep.subr.mxu0 0.0
    %161 = vmatpush1.msra.mxu0 0.0
    %162 = vmatprep.subr.mxu0 0.0
    %163 = vmatpush1.msra.mxu0 0.0
    %164 = vmatprep.subr.mxu0 0.0
    %165 = vmatpush1.msra.mxu0 0.0
    %166 = vmatprep.subr.mxu0 0.0
    %167 = vmatpush1.msra.mxu0 0.0
    %168 = vmatprep.subr.mxu0 0.0
    %169 = vmatpush1.msra.mxu0 0.0
    %170 = vmatprep.subr.mxu0 0.0
    %171 = vmatpush1.msra.mxu0 0.0
    %172 = vmatprep.subr.mxu0 0.0
    %173 = vmatpush1.msra.mxu0 0.0
    %174 = vmatprep.subr.mxu0 0.0
    %175 = vmatpush1.msra.mxu0 0.0
    %176 = vmatprep.subr.mxu0 0.0
    %177 = vmatpush1.msra.mxu0 0.0
    %178 = vmatprep.subr.mxu0 0.0
    %179 = vmatpush1.msra.mxu0 0.0
    %180 = vmatprep.subr.mxu0 0.0
    %181 = vmatpush1.msra.mxu0 0.0
    %182 = vmatprep.mubr.f32.mxu0 0.0
    %183 = vmatmul.mubr.f32.gmra.mrb[0].mxu0 %v113
    %v184 = vpop.f32.mrb[0].mxu0
    %v185 = vadd.f32 %v110, %v184
    %v186 = vpop.f32.mrb[0].mxu0
    %187 = vmatprep.mubr.f32.mxu0 0.0
    %188 = vmatmul.mubr.f32.gmra.mrb[0].mxu0 %v116
    %v189 = vpop.f32.mrb[0].mxu0
    %v190 = vadd.f32 %v111, %v189
    %v191 = vpop.f32.mrb[0].mxu0
    %192 = vdwg.mxu0
    %v193 = vmul.f32 %v103, %v185
    %v194 = vmul.f32 %v108, %v190
    %s195 = scalar_lea.vmem [#allocation2], 16
    %v196 = vld [vmem:[%s195] sm:$0xff]
    %v197 = vld [vmem:[%s195 + $0x8] sm:$0xff]
    %v198 = vld [vmem:[%s0 + $0x10] sm:$0xff]
    %v199 = vld [vmem:[%s0 + $0x18] sm:$0xff]
    %v200 = vsel %vm56, %v196, 0.0
    %v201 = vsel %vm56, %v197, 0.0
    %v202 = vadd.f32 %v200, %v201
    %v203 = vrot.slane %v202, 4
    %v204 = vadd.f32 %v202, %v203
    %v205 = vrot.slane %v204, 2
    %v206 = vadd.f32 %v204, %v205
    %v207 = vrot.slane %v206, 1
    %v208 = vadd.f32 %v206, %v207
    %v209 = vadd.f32 %v208, 1.00001
    %v210 = vrsqrt.pop %v209
    %211 = vxpose.xlu0.b32.start [1/16] %v210, 128
    %212 = vxpose.xlu0.b32.cont [2/16] 0.0, 128
    %213 = vxpose.xlu0.b32.cont [3/16] 0.0, 128
    %214 = vxpose.xlu0.b32.cont [4/16] 0.0, 128
    %215 = vxpose.xlu0.b32.cont [5/16] 0.0, 128
    %216 = vxpose.xlu0.b32.cont [6/16] 0.0, 128
    %217 = vxpose.xlu0.b32.cont [7/16] 0.0, 128
    %218 = vxpose.xlu0.b32.cont [8/16] 0.0, 128
    %219 = vxpose.xlu0.b32.cont [9/16] 0.0, 128
    %220 = vxpose.xlu0.b32.cont [10/16] 0.0, 128
    %221 = vxpose.xlu0.b32.cont [11/16] 0.0, 128
    %222 = vxpose.xlu0.b32.cont [12/16] 0.0, 128
    %223 = vxpose.xlu0.b32.cont [13/16] 0.0, 128
    %224 = vxpose.xlu0.b32.cont [14/16] 0.0, 128
    %225 = vxpose.xlu0.b32.cont [15/16] 0.0, 128
    %226 = vxpose.xlu0.b32.end [16/16] 0.0, 128
    %v227 = vpop.trf.xlu0
    %v228 = vpop.trf.xlu0
    %v229 = vpop.trf.xlu0
    %v230 = vpop.trf.xlu0
    %v231 = vpop.trf.xlu0
    %v232 = vpop.trf.xlu0
    %v233 = vpop.trf.xlu0
    %v234 = vpop.trf.xlu0
    %v235 = vpop.trf.xlu0
    %v236 = vpop.trf.xlu0
    %v237 = vpop.trf.xlu0
    %v238 = vpop.trf.xlu0
    %v239 = vpop.trf.xlu0
    %v240 = vpop.trf.xlu0
    %v241 = vpop.trf.xlu0
    %v242 = vpop.trf.xlu0
    %244 = vset.pattern.permute.xlu0 0
    %245 = vperm.xlu0 %244, %v227
    %v246 = vpop.permute.xlu0 %245
    %249 = vset.pattern.permute.xlu0 0
    %250 = vperm.xlu0 %249, %v228
    %v251 = vpop.permute.xlu0 %250
    %v253 = vmul.f32 %v246, %v198
    %v254 = vmul.f32 %v251, %v199
    %v256 = vsel %vm56, %v196, 0
    %v259 = vsel %vm56, %v197, 0
    %261 = vmatprep.subr.mxu0 0.0
    %262 = vmatpush1.msra.mxu0 %v253
    %263 = vmatprep.subr.mxu0 0.0
    %264 = vmatpush1.msra.mxu0 %v254
    %265 = vmatprep.subr.mxu0 0.0
    %266 = vmatpush1.msra.mxu0 0.0
    %267 = vmatprep.subr.mxu0 0.0
    %268 = vmatpush1.msra.mxu0 0.0
    %269 = vmatprep.subr.mxu0 0.0
    %270 = vmatpush1.msra.mxu0 0.0
    %271 = vmatprep.subr.mxu0 0.0
    %272 = vmatpush1.msra.mxu0 0.0
    %273 = vmatprep.subr.mxu0 0.0
    %274 = vmatpush1.msra.mxu0 0.0
    %275 = vmatprep.subr.mxu0 0.0
    %276 = vmatpush1.msra.mxu0 0.0
    %277 = vmatprep.subr.mxu0 0.0
    %278 = vmatpush1.msra.mxu0 0.0
    %279 = vmatprep.subr.mxu0 0.0
    %280 = vmatpush1.msra.mxu0 0.0
    %281 = vmatprep.subr.mxu0 0.0
    %282 = vmatpush1.msra.mxu0 0.0
    %283 = vmatprep.subr.mxu0 0.0
    %284 = vmatpush1.msra.mxu0 0.0
    %285 = vmatprep.subr.mxu0 0.0
    %286 = vmatpush1.msra.mxu0 0.0
    %287 = vmatprep.subr.mxu0 0.0
    %288 = vmatpush1.msra.mxu0 0.0
    %289 = vmatprep.subr.mxu0 0.0
    %290 = vmatpush1.msra.mxu0 0.0
    %291 = vmatprep.subr.mxu0 0.0
    %292 = vmatpush1.msra.mxu0 0.0
    %293 = vmatprep.subr.mxu0 0.0
    %294 = vmatpush1.msra.mxu0 0.0
    %295 = vmatprep.subr.mxu0 0.0
    %296 = vmatpush1.msra.mxu0 0.0
    %297 = vmatprep.subr.mxu0 0.0
    %298 = vmatpush1.msra.mxu0 0.0
    %299 = vmatprep.subr.mxu0 0.0
    %300 = vmatpush1.msra.mxu0 0.0
    %301 = vmatprep.subr.mxu0 0.0
    %302 = vmatpush1.msra.mxu0 0.0
    %303 = vmatprep.subr.mxu0 0.0
    %304 = vmatpush1.msra.mxu0 0.0
    %305 = vmatprep.subr.mxu0 0.0
    %306 = vmatpush1.msra.mxu0 0.0
    %307 = vmatprep.subr.mxu0 0.0
    %308 = vmatpush1.msra.mxu0 0.0
    %309 = vmatprep.subr.mxu0 0.0
    %310 = vmatpush1.msra.mxu0 0.0
    %311 = vmatprep.subr.mxu0 0.0
    %312 = vmatpush1.msra.mxu0 0.0
    %313 = vmatprep.subr.mxu0 0.0
    %314 = vmatpush1.msra.mxu0 0.0
    %315 = vmatprep.subr.mxu0 0.0
    %316 = vmatpush1.msra.mxu0 0.0
    %317 = vmatprep.subr.mxu0 0.0
    %318 = vmatpush1.msra.mxu0 0.0
    %319 = vmatprep.subr.mxu0 0.0
    %320 = vmatpush1.msra.mxu0 0.0
    %321 = vmatprep.subr.mxu0 0.0
    %322 = vmatpush1.msra.mxu0 0.0
    %323 = vmatprep.subr.mxu0 0.0
    %324 = vmatpush1.msra.mxu0 0.0
    %325 = vmatprep.mubr.f32.mxu0 0.0
    %326 = vmatmul.mubr.f32.gmra.mrb[0].mxu0 %v256
    %v327 = vpop.f32.mrb[0].mxu0
    %v328 = vadd.f32 %v253, %v327
    %v329 = vpop.f32.mrb[0].mxu0
    %330 = vmatprep.mubr.f32.mxu0 0.0
    %331 = vmatmul.mubr.f32.gmra.mrb[0].mxu0 %v259
    %v332 = vpop.f32.mrb[0].mxu0
    %v333 = vadd.f32 %v254, %v332
    %v334 = vpop.f32.mrb[0].mxu0
    %335 = vdwg.mxu0
    %v336 = vmul.f32 %v246, %v328
    %v337 = vmul.f32 %v251, %v333
    %v338 = vld [vmem:[#allocation5] sm:$0xff]
    %v339 = vld [vmem:[#allocation5 + $0x8] sm:$0xff]
    %v340 = vld [vmem:[#allocation5 + $0x10] sm:$0xff]
    %v341 = vld [vmem:[#allocation5 + $0x18] sm:$0xff]
    %v342 = vld [vmem:[%s4] sm:$0x1]
    %v344 = vlaneseq
    %v345 = vshrl.u32 %v344, 7
    %v346 = vsub.s32 0, %v345
    %v347 = vrot.slane %v342, %v346
    %vm349 = vcmask 261120
    %v351 = vsel %vm349, %v193, 0
    %v354 = vsel %vm349, %v194, 0
    %v357 = vsel %vm349, %v336, 0
    %v360 = vsel %vm349, %v337, 0
    %362 = vmatprep.subr.mxu0 0.0
    %363 = vmatpush1.msra.mxu0 %v338
    %364 = vmatprep.subr.mxu0 0.0
    %365 = vmatpush1.msra.mxu0 %v339
    %366 = vmatprep.subr.mxu0 0.0
    %367 = vmatpush1.msra.mxu0 %v340
    %368 = vmatprep.subr.mxu0 0.0
    %369 = vmatpush1.msra.mxu0 %v341
    %370 = vmatprep.subr.mxu0 0.0
    %371 = vmatpush1.msra.mxu0 0.0
    %372 = vmatprep.subr.mxu0 0.0
    %373 = vmatpush1.msra.mxu0 0.0
    %374 = vmatprep.subr.mxu0 0.0
    %375 = vmatpush1.msra.mxu0 0.0
    %376 = vmatprep.subr.mxu0 0.0
    %377 = vmatpush1.msra.mxu0 0.0
    %378 = vmatprep.subr.mxu0 0.0
    %379 = vmatpush1.msra.mxu0 0.0
    %380 = vmatprep.subr.mxu0 0.0
    %381 = vmatpush1.msra.mxu0 0.0
    %382 = vmatprep.subr.mxu0 0.0
    %383 = vmatpush1.msra.mxu0 0.0
    %384 = vmatprep.subr.mxu0 0.0
    %385 = vmatpush1.msra.mxu0 0.0
    %386 = vmatprep.subr.mxu0 0.0
    %387 = vmatpush1.msra.mxu0 0.0
    %388 = vmatprep.subr.mxu0 0.0
    %389 = vmatpush1.msra.mxu0 0.0
    %390 = vmatprep.subr.mxu0 0.0
    %391 = vmatpush1.msra.mxu0 0.0
    %392 = vmatprep.subr.mxu0 0.0
    %393 = vmatpush1.msra.mxu0 0.0
    %394 = vmatprep.subr.mxu0 0.0
    %395 = vmatpush1.msra.mxu0 0.0
    %396 = vmatprep.subr.mxu0 0.0
    %397 = vmatpush1.msra.mxu0 0.0
    %398 = vmatprep.subr.mxu0 0.0
    %399 = vmatpush1.msra.mxu0 0.0
    %400 = vmatprep.subr.mxu0 0.0
    %401 = vmatpush1.msra.mxu0 0.0
    %402 = vmatprep.subr.mxu0 0.0
    %403 = vmatpush1.msra.mxu0 0.0
    %404 = vmatprep.subr.mxu0 0.0
    %405 = vmatpush1.msra.mxu0 0.0
    %406 = vmatprep.subr.mxu0 0.0
    %407 = vmatpush1.msra.mxu0 0.0
    %408 = vmatprep.subr.mxu0 0.0
    %409 = vmatpush1.msra.mxu0 0.0
    %410 = vmatprep.subr.mxu0 0.0
    %411 = vmatpush1.msra.mxu0 0.0
    %412 = vmatprep.subr.mxu0 0.0
    %413 = vmatpush1.msra.mxu0 0.0
    %414 = vmatprep.subr.mxu0 0.0
    %415 = vmatpush1.msra.mxu0 0.0
    %416 = vmatprep.subr.mxu0 0.0
    %417 = vmatpush1.msra.mxu0 0.0
    %418 = vmatprep.subr.mxu0 0.0
    %419 = vmatpush1.msra.mxu0 0.0
    %420 = vmatprep.subr.mxu0 0.0
    %421 = vmatpush1.msra.mxu0 0.0
    %422 = vmatprep.subr.mxu0 0.0
    %423 = vmatpush1.msra.mxu0 0.0
    %424 = vmatprep.subr.mxu0 0.0
    %425 = vmatpush1.msra.mxu0 0.0
    %426 = vmatprep.mubr.f32.mxu0 0.0
    %427 = vmatmul.mubr.f32.gmra.mrb[0].mxu0 %v351
    %v428 = vpop.f32.mrb[0].mxu0
    %v429 = vadd.f32 %v347, %v428
    %v430 = vpop.f32.mrb[0].mxu0
    %431 = vmatprep.mubr.f32.mxu0 0.0
    %432 = vmatmul.mubr.f32.gmra.mrb[0].mxu0 %v354
    %v433 = vpop.f32.mrb[0].mxu0
    %v434 = vadd.f32 %v347, %v433
    %v435 = vpop.f32.mrb[0].mxu0
    %436 = vmatprep.mubr.f32.mxu0 0.0
    %437 = vmatmul.mubr.f32.gmra.mrb[0].mxu0 %v357
    %v438 = vpop.f32.mrb[0].mxu0
    %v439 = vadd.f32 %v347, %v438
    %v440 = vpop.f32.mrb[0].mxu0
    %441 = vmatprep.mubr.f32.mxu0 0.0
    %442 = vmatmul.mubr.f32.gmra.mrb[0].mxu0 %v360
    %v443 = vpop.f32.mrb[0].mxu0
    %v444 = vadd.f32 %v347, %v443
    %v445 = vpop.f32.mrb[0].mxu0
    %446 = vdwg.mxu0
    %v447 = vld [vmem:[%s2] sm:$0xff]
    %v448 = vld [vmem:[%s2 + $0x8] sm:$0xff]
    %v449 = vld [vmem:[%s2 + $0x10] sm:$0xff]
    %v450 = vld [vmem:[%s2 + $0x18] sm:$0xff]
    %452 = vset.pattern.permute.xlu0 0
    %453 = vperm.xlu0 %452, %v447
    %v454 = vpop.permute.xlu0 %453
    %457 = vset.pattern.permute.xlu0 0
    %458 = vperm.xlu0 %457, %v448
    %v459 = vpop.permute.xlu0 %458
    %462 = vset.pattern.permute.xlu0 0
    %463 = vperm.xlu0 %462, %v449
    %v464 = vpop.permute.xlu0 %463
    %467 = vset.pattern.permute.xlu0 0
    %468 = vperm.xlu0 %467, %v450
    %v469 = vpop.permute.xlu0 %468
    %v471 = vmul.f32 %v429, %v454
    %v472 = vmul.f32 %v434, %v459
    %v473 = vmul.f32 %v439, %v464
    %v474 = vmul.f32 %v444, %v469
    %v475 = vld [vmem:[%s5] sm:$0x1]
    %v477 = vlaneseq
    %v478 = vshrl.u32 %v477, 7
    %v479 = vsub.s32 0, %v478
    %v480 = vrot.slane %v475, %v479
    %v482 = vadd.f32 %v471, %v480
    %v483 = vadd.f32 %v472, %v480
    %v484 = vadd.f32 %v473, %v480
    %v485 = vadd.f32 %v474, %v480
    %486 = vst.msk [vmem:[#allocation7] sm:$0xff] %vm349, %v482
    %487 = vst.msk [vmem:[#allocation7 + $0x8] sm:$0xff] %vm349, %v483
    %488 = vst.msk [vmem:[#allocation7 + $0x10] sm:$0xff] %vm349, %v484
    %489 = vst.msk [vmem:[#allocation7 + $0x18] sm:$0xff] %vm349, %v485
    // Predicated region
    $region34: #{tpu_custom_call.1} parent=1 // pred_check
      _
    $region35: #{tpu_custom_call.1} parent=1 // pred_check_branch
      %491 = sbr.rel (0) target = $region37
    $region36: #{tpu_custom_call.1} parent=1 // pred_region
      %s493 = ssub.s32 512, 512
      %494 = vsyncadd [#allocation4], %s493
      %s495 = sshll.u32 [#allocation7], 4
      %s496 = int_to_ptr.vmem [resolvable:$true] %s495
      %501 = dma.vmem_to_hbm [thread:$0]  %s496, 512, %s6, [#allocation4], 128, 128, 8
    $region37: #{tpu_custom_call.1} parent=1 // pred_fallthru
      _
    // Predicated region
    $region38: #{tpu_custom_call.1} parent=1 // pred_check
      _
    $region39: #{tpu_custom_call.1} parent=1 // pred_check_branch
      %503 = sbr.rel (0) target = $region41
    $region40: #{tpu_custom_call.1} parent=1 // pred_region
      %504 = dma.done [#allocation4], 512
    $region41: #{tpu_custom_call.1} parent=1 // pred_fallthru
      _
    %505 = vsyncpa [#allocation3], 1
    %506 = vsyncpa [#allocation6], 1
    %507 = vsyncpa [#allocation4], 1

</llo_original>
